<compile_context>
chip_gen: v6e
topology: v6e:2x2x1
jax: 0.10.0
libtpu: 0.0.40
codegen_flags: <defaults>
</compile_context>

<pallas_src>
import functools

import jax
import jax.numpy as jnp
from jax.experimental import pallas as pl
from jax.experimental.pallas import tpu as pltpu


def _round_up(x, m):
    return ((x + m - 1) // m) * m


def _split(size, max_tile, unit):
    """Round `size` up to `unit`, split into equal tiles (each a multiple of
    `unit`, near `max_tile`).  Returns (n_blocks, tile, padded_size)."""
    padded = _round_up(size, unit)
    n = max(1, (padded + max_tile - 1) // max_tile)
    tile = _round_up((padded + n - 1) // n, unit)
    return n, tile, n * tile


def _tpu_caps():
    """Generation-aware tile caps and VMEM budget."""
    kind = ""
    try:
        kind = jax.devices()[0].device_kind.lower()
    except Exception:
        pass
    if "v7" in kind:
        # v7x: 64 MiB VMEM per TC, 2 TensorCores -> smaller tiles, keep the
        # double-buffered footprint well under ~48 MiB, feed both cores.
        return dict(max_tm=512, max_tn=256, max_tk=512,
                    vmem_cap=48 << 20, multi_core=True)
    # v5e / v6e: 128 MiB VMEM, single TC -> big tiles to cut re-stream factors.
    return dict(max_tm=1024, max_tn=512, max_tk=1024,
                vmem_cap=100 << 20, multi_core=False)


def _linear_kernel(x_ref, w_ref, b_ref, o_ref):
    """One (tm, tn) output tile; K is the innermost ('arbitrary') grid axis.

    The f32 output block is VMEM-resident across K, so it doubles as the
    accumulator: init with the broadcast bias at k == 0, then accumulate
    bf16 x bf16 -> f32 MXU partial products directly into it.
    """
    @pl.when(pl.program_id(2) == 0)
    def _():
        o_ref[...] = jnp.broadcast_to(b_ref[...], o_ref.shape).astype(o_ref.dtype)

    o_ref[...] += jnp.dot(x_ref[...], w_ref[...],
                          preferred_element_type=jnp.float32)


def _linear_forward(x, w_t_pad, b_pad, *, d_output, tn, n_n, tk, n_k,
                    max_tm, vmem_cap, multi_core):
    """Fused (under jit): bf16 cast + M/K pad -> tiled pallas matmul -> slice."""
    B, K = x.shape
    Kp, Np = w_t_pad.shape

    # --- M tiling (shape-dependent; static Python ints under jit). ----------
    m8 = _round_up(B, 8)
    n_m = max(1, (m8 + max_tm - 1) // max_tm)
    if multi_core and n_m * n_n < 2 and m8 >= 16:
        n_m = 2                      # give v7x's second TensorCore a block
    tm = _round_up((m8 + n_m - 1) // n_m, 8)
    Mp = n_m * tm

    # --- Cast to bf16 (MXU-native, halves HBM/VMEM traffic), pad M (and K
    #     only in the multi-K-block case; Kp == K otherwise). ----------------
    x_bf = x.astype(jnp.bfloat16)
    if (Mp, Kp) != (B, K):
        x_bf = jnp.pad(x_bf, ((0, Mp - B), (0, Kp - K)))

    grid = (n_m, n_n, n_k)

    # Truthful HBM-traffic hint: each input is re-streamed by the opposite
    # output-grid extent; the f32 output is written once.
    cost = pl.CostEstimate(
        flops=2 * Mp * Kp * Np,
        transcendentals=0,
        bytes_accessed=int(2 * (Mp * Kp * n_n + Kp * Np * n_m)
                           + 4 * (Mp * Np + Np)),
    )

    # Double-buffered bf16 inputs + double-buffered f32 output + bias tile.
    tile_bytes = 2 * 2 * (tm * tk + tk * tn) + 2 * 4 * tm * tn + 4 * 8 * tn
    vmem_limit = int(min(max(2 * tile_bytes, 32 << 20), vmem_cap))

    out_pad = pl.pallas_call(
        _linear_kernel,
        out_shape=jax.ShapeDtypeStruct((Mp, Np), jnp.float32),
        grid_spec=pltpu.PrefetchScalarGridSpec(
            num_scalar_prefetch=0,
            grid=grid,
            in_specs=[
                pl.BlockSpec((tm, tk), lambda i, j, k: (i, k)),
                pl.BlockSpec((tk, tn), lambda i, j, k: (k, j)),
                pl.BlockSpec((1, tn), lambda i, j, k: (0, j)),
            ],
            out_specs=pl.BlockSpec((tm, tn), lambda i, j, k: (i, j)),
        ),
        compiler_params=pltpu.CompilerParams(
            dimension_semantics=("parallel", "parallel", "arbitrary"),
            vmem_limit_bytes=vmem_limit,
        ),
        cost_estimate=cost,
    )(x_bf, w_t_pad, b_pad)

    return out_pad[:B, :d_output]


class LinearRegression:
    """JAX/Pallas mirror of the PyTorch module (torch.nn.Linear forward)."""

    def __init__(self, d_input, d_output, key):
        # torch.nn.Linear default init: U(-1/sqrt(d_in), 1/sqrt(d_in)).
        kw, kb = jax.random.split(key)
        bound = 1.0 / (float(d_input) ** 0.5)
        self.weight = jax.random.uniform(
            kw, (d_output, d_input), jnp.float32, -bound, bound)
        self.bias = jax.random.uniform(
            kb, (d_output,), jnp.float32, -bound, bound)
        self.d_input = d_input
        self.d_output = d_output

        caps = _tpu_caps()

        # N: lane-dense (multiple of 128) so output stores are unmasked vst.
        n_n, tn, Np = _split(d_output, caps["max_tn"], 128)
        # K: single full-extent block when it fits (no K padding of x at all);
        #    otherwise a 128-aligned multi-block reduction.
        if d_input <= caps["max_tk"]:
            n_k, tk, Kp = 1, d_input, d_input
        else:
            n_k, tk, Kp = _split(d_input, caps["max_tk"], 128)

        # One-time layout prep: transpose + zero-pad + bf16-cast the weight.
        self._w_t_pad = (
            jnp.zeros((Kp, Np), jnp.bfloat16)
            .at[:d_input, :d_output].set(self.weight.T.astype(jnp.bfloat16))
        )
        self._b_pad = (
            jnp.zeros((1, Np), jnp.float32).at[0, :d_output].set(self.bias)
        )

        self._forward = jax.jit(functools.partial(
            _linear_forward,
            d_output=d_output, tn=tn, n_n=n_n, tk=tk, n_k=n_k,
            max_tm=caps["max_tm"], vmem_cap=caps["vmem_cap"],
            multi_core=caps["multi_core"],
        ))

    def __call__(self, x):
        return self._forward(x, self._w_t_pad, self._b_pad)


if __name__ == "__main__":
    key = jax.random.PRNGKey(0)
    k_p1, k_x1, k_p2, k_x2 = jax.random.split(key, 4)

    def bf16_ref(model, x):
        # Reference with the same bf16-operand / f32-accumulate numerics.
        return (jnp.dot(x.astype(jnp.bfloat16),
                        model.weight.T.astype(jnp.bfloat16),
                        preferred_element_type=jnp.float32) + model.bias)

    def f32_ref(model, x):
        return jnp.dot(x, model.weight.T) + model.bias

    # Case 1: tiny shapes consistent with the regression module.
    d_in, d_out, batch = 16, 8, 8
    model = LinearRegression(d_in, d_out, k_p1)
    x = jax.random.normal(k_x1, (batch, d_in), jnp.float32)
    out = jax.block_until_ready(model(x))
    assert out.shape == (batch, d_out)
    assert jnp.allclose(out, bf16_ref(model, x), atol=1e-3, rtol=1e-2), "case1 bf16 mismatch"
    assert jnp.allclose(out, f32_ref(model, x), atol=5e-2, rtol=5e-2), "case1 f32 mismatch"

    # Case 2: exercises M padding, lane-padded N and a full-extent K block.
    d_in2, d_out2, batch2 = 300, 130, 20
    model2 = LinearRegression(d_in2, d_out2, k_p2)
    x2 = jax.random.normal(k_x2, (batch2, d_in2), jnp.float32)
    out2 = jax.block_until_ready(model2(x2))
    assert out2.shape == (batch2, d_out2)
    assert jnp.allclose(out2, bf16_ref(model2, x2), atol=2e-3, rtol=2e-2), "case2 bf16 mismatch"
    assert jnp.allclose(out2, f32_ref(model2, x2), atol=5e-2, rtol=5e-2), "case2 f32 mismatch"

    print("KERNEL_OK")
</pallas_src>

<mosaic_0001>
module attributes {stable_mosaic.version = 11 : i64} {
  func.func @_linear_kernel(%arg0: i32, %arg1: i32, %arg2: i32, %arg3: memref<8x16xbf16, #tpu.memory_space<vmem>>, %arg4: memref<16x128xbf16, #tpu.memory_space<vmem>>, %arg5: memref<1x128xf32, #tpu.memory_space<vmem>>, %arg6: memref<8x128xf32, #tpu.memory_space<vmem>>) attributes {dimension_semantics = [#tpu.dimension_semantics<parallel>, #tpu.dimension_semantics<parallel>, #tpu.dimension_semantics<arbitrary>], iteration_bounds = array<i64: 1, 1, 1>, scalar_prefetch = 0 : i64, scratch_operands = 0 : i64, tpu.core_type = #tpu.core_type<tc>, window_params = [{transform_indices = @transform_0, window_bounds = array<i64: 8, 16>}, {transform_indices = @transform_1, window_bounds = array<i64: 16, 128>}, {transform_indices = @transform_2, window_bounds = array<i64: 1, 128>}, {transform_indices = @transform_3, window_bounds = array<i64: 8, 128>}]} {
    %c0_i32 = arith.constant 0 : i32
    %0 = arith.cmpi eq, %arg2, %c0_i32 : i32
    %1 = arith.extui %0 : i1 to i32
    %c0_i32_0 = arith.constant 0 : i32
    %2 = arith.cmpi ne, %1, %c0_i32_0 : i32
    scf.if %2 {
      %c0_8 = arith.constant 0 : index
      %c0_9 = arith.constant 0 : index
      %9 = vector.load %arg5[%c0_8, %c0_9] : memref<1x128xf32, #tpu.memory_space<vmem>>, vector<1x128xf32>
      %10 = vector.shape_cast %9 : vector<1x128xf32> to vector<1x128xf32>
      %11 = vector.broadcast %10 : vector<1x128xf32> to vector<8x128xf32>
      %c0_10 = arith.constant 0 : index
      %c0_11 = arith.constant 0 : index
      %12 = vector.load %arg6[%c0_10, %c0_11] : memref<8x128xf32, #tpu.memory_space<vmem>>, vector<8x128xf32>
      tpu.vector_store %arg6[%c0_10, %c0_11], %11 {strides = array<i32>} : memref<8x128xf32, #tpu.memory_space<vmem>>, vector<8x128xf32>,
    } else {
    }
    %c0 = arith.constant 0 : index
    %c0_1 = arith.constant 0 : index
    %3 = vector.load %arg6[%c0, %c0_1] : memref<8x128xf32, #tpu.memory_space<vmem>>, vector<8x128xf32>
    %c0_2 = arith.constant 0 : index
    %c0_3 = arith.constant 0 : index
    %4 = vector.load %arg3[%c0_2, %c0_3] : memref<8x16xbf16, #tpu.memory_space<vmem>>, vector<8x16xbf16>
    %c0_4 = arith.constant 0 : index
    %c0_5 = arith.constant 0 : index
    %5 = vector.load %arg4[%c0_4, %c0_5] : memref<16x128xbf16, #tpu.memory_space<vmem>>, vector<16x128xbf16>
    %cst = arith.constant dense<0.000000e+00> : vector<8x128xf32>
    %6 = tpu.matmul %4, %5, %cst {dimension_numbers = #tpu.dot_dimension_numbers<[1], [0], [0], [1], [0, 0, 1, 1], [], []>} : vector<8x16xbf16>, vector<16x128xbf16>, vector<8x128xf32> -> vector<8x128xf32>
    %7 = arith.addf %3, %6 : vector<8x128xf32>
    %c0_6 = arith.constant 0 : index
    %c0_7 = arith.constant 0 : index
    %8 = vector.load %arg6[%c0_6, %c0_7] : memref<8x128xf32, #tpu.memory_space<vmem>>, vector<8x128xf32>
    tpu.vector_store %arg6[%c0_6, %c0_7], %7 {strides = array<i32>} : memref<8x128xf32, #tpu.memory_space<vmem>>, vector<8x128xf32>,
    return
  }
  func.func @transform_0(%arg0: i32, %arg1: i32, %arg2: i32) -> (i32, i32) {
    %c0_i32 = arith.constant 0 : i32
    return %arg0, %arg2 : i32, i32
  }
  func.func @transform_1(%arg0: i32, %arg1: i32, %arg2: i32) -> (i32, i32) {
    %c0_i32 = arith.constant 0 : i32
    return %arg2, %arg1 : i32, i32
  }
  func.func @transform_2(%arg0: i32, %arg1: i32, %arg2: i32) -> (i32, i32) {
    %c0_i32 = arith.constant 0 : i32
    %c0_i32_0 = arith.constant 0 : i32
    return %c0_i32, %arg1 : i32, i32
  }
  func.func @transform_3(%arg0: i32, %arg1: i32, %arg2: i32) -> (i32, i32) {
    %c0_i32 = arith.constant 0 : i32
    return %arg0, %arg1 : i32, i32
  }
}

</mosaic_0001>

<llo_original>
// kernel: _linear_forward.1
$region0: #{_linear_forward.1}
  #allocation0 [shape = 'u32[]', space=smem, size = 0x4, offset = 0x4, fixed_abs, tag = 'smem constant byte address 0x4 - core index']
  #allocation1 [shape = 'u32[144,128]{1,0:T(1,128)}', space=vmem, size = 0x12000, scoped, tag = 'internal scratch']
  %s0 = inlined_call_operand.vmem [shape: bf16[8,16], index: 0, kind: input, shape index: {}]
  %s1 = inlined_call_operand.vmem [shape: bf16[16,128], index: 1, kind: input, shape index: {}]
  %s2 = inlined_call_operand.vmem [shape: f32[1,128], index: 2, kind: input, shape index: {}]
  %s3 = inlined_call_operand.hbm [shape: f32[8,128], index: 3, kind: output, shape index: {}]
  %s4 = sld [smem:[#allocation0]]
  $region26: #{_linear_forward.1} parent=0
    _
  %s6 = ssub.s32 1, %s4
  %s7 = scalar_select 0, %s6, %s4
  $region1: #{_linear_forward.1} parent=0
    #allocation2 [shape = 'u8[4096]{0}', space=vmem, size = 0x1000, scoped, tag = 'output window, operand 0, single buffered']
    #allocation3 [shape = 's32[1]{0}', space=sflag, size = 0x4, scoped, tag = 'scoped memory for _linear_forward.1']
    %8 = vsyncpa [#allocation3], 0
    // Predicated region
    $region2: #{_linear_forward.1} parent=1 // pred_check
      _
    $region3: #{_linear_forward.1} parent=1 // pred_check_branch
      %10 = sbr.rel (0) target = $region5
    $region4: #{_linear_forward.1} parent=1 // pred_region
      _
    $region5: #{_linear_forward.1} parent=1 // pred_fallthru
      _
    // Predicated region
    $region6: #{_linear_forward.1} parent=1 // pred_check
      _
    $region7: #{_linear_forward.1} parent=1 // pred_check_branch
      %12 = sbr.rel (0) target = $region9
    $region8: #{_linear_forward.1} parent=1 // pred_region
      _
    $region9: #{_linear_forward.1} parent=1 // pred_fallthru
      _
    // Predicated region
    $region10: #{_linear_forward.1} parent=1 // pred_check
      _
    $region11: #{_linear_forward.1} parent=1 // pred_check_branch
      %14 = sbr.rel (0) target = $region13
    $region12: #{_linear_forward.1} parent=1 // pred_region
      _
    $region13: #{_linear_forward.1} parent=1 // pred_fallthru
      _
    %p16 = scmp.eq.s32.totalorder 0, 0
    // Predicated region
    $region14: #{_linear_forward.1} parent=1 // pred_check
      %p17 = pneg %p16
    $region15: #{_linear_forward.1} parent=1 // pred_check_branch
      %19 = sbr.rel (%p17) target = $region17
    $region16: #{_linear_forward.1} parent=1 // pred_region
      %v20 = vld [vmem:[%s2] sm:$0x1]
      %v22 = vlaneseq
      %v23 = vshrl.u32 %v22, 7
      %v24 = vsub.s32 0, %v23
      %v25 = vrot.slane %v20, %v24
      %27 = vst [vmem:[#allocation2] sm:$0xff] %v25
    $region17: #{_linear_forward.1} parent=1 // pred_fallthru
      _
    %v28 = vld [vmem:[#allocation2] sm:$0xff]
    %v29 = vld [vmem:[%s0] sm:$0xf]
    %v30 = vld [vmem:[%s1] sm:$0xf]
    %v31 = vld [vmem:[%s1 + $0x4] sm:$0xf]
    %v34 = vunpack.c.l.b16 %v30
    %v35 = vunpack.c.l.b16 %v31
    %v36 = vpack.c.b16 %v35, %v34
    %vm38 = vcmask 130048
    %v40 = vsel %vm38, %v29, 0
    %42 = vmatprep.subr.bf16.mxu0 0
    %43 = vmatpush1.bf16.msra.mxu0 0
    %44 = vmatprep.subr.bf16.mxu0 0
    %45 = vmatpush1.bf16.msra.mxu0 0
    %46 = vmatprep.subr.bf16.mxu0 0
    %47 = vmatpush1.bf16.msra.mxu0 0
    %48 = vmatprep.subr.bf16.mxu0 0
    %49 = vmatpush1.bf16.msra.mxu0 0
    %50 = vmatprep.subr.bf16.mxu0 0
    %51 = vmatpush1.bf16.msra.mxu0 0
    %52 = vmatprep.subr.bf16.mxu0 0
    %53 = vmatpush1.bf16.msra.mxu0 0
    %54 = vmatprep.subr.bf16.mxu0 0
    %55 = vmatpush1.bf16.msra.mxu0 0
    %56 = vmatprep.subr.bf16.mxu0 0
    %57 = vmatpush1.bf16.msra.mxu0 %v36
    %58 = vmatprep.subr.bf16.mxu0 0
    %59 = vmatpush2.bf16.msra.mxu0 0
    %60 = vmatprep.subr.bf16.mxu0 0
    %61 = vmatpush2.bf16.msra.mxu0 0
    %62 = vmatprep.subr.bf16.mxu0 0
    %63 = vmatpush2.bf16.msra.mxu0 0
    %64 = vmatprep.subr.bf16.mxu0 0
    %65 = vmatpush2.bf16.msra.mxu0 0
    %66 = vmatprep.subr.bf16.mxu0 0
    %67 = vmatpush2.bf16.msra.mxu0 0
    %68 = vmatprep.subr.bf16.mxu0 0
    %69 = vmatpush2.bf16.msra.mxu0 0
    %70 = vmatprep.subr.bf16.mxu0 0
    %71 = vmatpush2.bf16.msra.mxu0 0
    %72 = vmatprep.subr.bf16.mxu0 0
    %73 = vmatpush2.bf16.msra.mxu0 0
    %74 = vmatprep.mubr.bf16.mxu0 0
    %75 = vmatmul.mubr.bf16.gmra.mxu0 %v40
    %v76 = vpop.f32.mrf.mxu0
    %v77 = vadd.f32 0.0, %v76
    %v78 = vpop.f32.mrf.mxu0
    %v79 = vpop.f32.mrf.mxu0
    %v80 = vpop.f32.mrf.mxu0
    %81 = vdwg.mxu0
    %v82 = vadd.f32 %v28, %v77
    %83 = vst [vmem:[#allocation2] sm:$0xff] %v82
    // Predicated region
    $region18: #{_linear_forward.1} parent=1 // pred_check
      _
    $region19: #{_linear_forward.1} parent=1 // pred_check_branch
      %85 = sbr.rel (0) target = $region21
    $region20: #{_linear_forward.1} parent=1 // pred_region
      %s87 = ssub.s32 128, 128
      %88 = vsyncadd [#allocation3], %s87
      %s90 = sshll.u32 [#allocation2], 4
      %s91 = int_to_ptr.vmem [resolvable:$true] %s90
      %93 = dma.vmem_to_hbm [thread:$0]  %s91, 128, %s3, [#allocation3]
    $region21: #{_linear_forward.1} parent=1 // pred_fallthru
      _
    // Predicated region
    $region22: #{_linear_forward.1} parent=1 // pred_check
      _
    $region23: #{_linear_forward.1} parent=1 // pred_check_branch
      %95 = sbr.rel (0) target = $region25
    $region24: #{_linear_forward.1} parent=1 // pred_region
      %96 = dma.done [#allocation3], 128
    $region25: #{_linear_forward.1} parent=1 // pred_fallthru
      _
    %97 = vsyncpa [#allocation3], 1

</llo_original>
